<compile_context>
chip_gen: v6e
topology: v6e:2x2x1
jax: 0.10.0
libtpu: 0.0.40
codegen_flags: <defaults>
</compile_context>

<pallas_src>
import jax
import jax.numpy as jnp
from jax.experimental import pallas as pl
from jax.experimental.pallas import tpu as pltpu


# itemsize (bytes) -> sublane packing (rows per packed vreg)
_SUBLANE_PACK = {4: 8, 2: 16, 1: 32}
_MAX_DMA_CHUNKS = 4  # enough in-flight DMAs to saturate HBM; no grid needed


def _row_chunks(m: int, itemsize: int, max_chunks: int = _MAX_DMA_CHUNKS):
    """Static (start, rows) chunks covering [0, m), starts pack-aligned."""
    pack = _SUBLANE_PACK.get(itemsize, 8)
    n_groups = (m + pack - 1) // pack            # number of sublane groups
    num_chunks = max(1, min(max_chunks, n_groups))
    base, extra = divmod(n_groups, num_chunks)
    chunks = []
    start = 0
    for i in range(num_chunks):
        rows = (base + (1 if i < extra else 0)) * pack
        rows = min(rows, m - start)              # clamp ragged tail to m
        if rows > 0:
            chunks.append((start, rows))
            start += rows
    return chunks


def _make_hbm_copy_kernel(chunks):
    """Gridless kernel: chunked HBM->HBM DMA copy of an (m, 256) array."""

    def kernel(x_hbm, o_hbm, sems):
        copies = [
            pltpu.make_async_copy(
                x_hbm.at[start:start + rows, :],   # static slices: free views
                o_hbm.at[start:start + rows, :],
                sems.at[idx],
            )
            for idx, (start, rows) in enumerate(chunks)
        ]
        for cp in copies:      # start every DMA first (all kept in flight) ...
            cp.start()
        for cp in copies:      # ... then wait on all of them
            cp.wait()

    return kernel


def reshape_to_v256(x: jax.Array, *, materialize: bool = False) -> jax.Array:
    """Equivalent of torch.Tensor.view(-1, 256) for a contiguous tensor.

    Default (materialize=False): metadata-only reshape — no kernel, no HBM
    traffic, matches .view() semantics exactly for a contiguous array.

    materialize=True: additionally produce a fresh (m, 256) buffer via a
    Pallas HBM->HBM DMA copy (for callers that need a new allocation).
    """
    total = x.size
    if total % 256 != 0:
        raise ValueError(f"total elements {total} not divisible by 256")
    m = total // 256

    # The semantic forward: free, metadata-only row-major reshape.
    x_flat = x.reshape(m, 256)
    if not materialize:
        return x_flat

    itemsize = jnp.dtype(x.dtype).itemsize
    chunks = _row_chunks(m, itemsize)

    return pl.pallas_call(
        _make_hbm_copy_kernel(chunks),
        out_shape=jax.ShapeDtypeStruct((m, 256), x.dtype),
        in_specs=[pl.BlockSpec(memory_space=pl.ANY)],   # stay in HBM, no auto-DMA
        out_specs=pl.BlockSpec(memory_space=pl.ANY),
        scratch_shapes=[pltpu.SemaphoreType.DMA((len(chunks),))],
        cost_estimate=pl.CostEstimate(
            flops=0,
            transcendentals=0,
            bytes_accessed=2 * m * 256 * itemsize,      # read + write
        ),
    )(x_flat)


if __name__ == "__main__":
    key = jax.random.PRNGKey(0)

    # Small NCHW input consistent with the module: (2, 4, 16, 16) -> 2048
    # elements -> output (8, 256).
    x = jax.random.normal(key, (2, 4, 16, 16), dtype=jnp.float32)
    ref = x.reshape(-1, 256)

    # Default path: metadata-only reshape (no Pallas kernel, zero HBM traffic).
    out_view = jax.block_until_ready(reshape_to_v256(x))
    assert out_view.shape == (8, 256) and out_view.dtype == x.dtype
    assert jnp.array_equal(out_view, ref), "view-path mismatch vs reference"

    # Materializing path: gridless Pallas HBM->HBM DMA copy.
    out = jax.block_until_ready(reshape_to_v256(x, materialize=True))
    assert out.shape == (8, 256) and out.dtype == x.dtype
    assert jnp.array_equal(out, ref), "pallas-path mismatch vs reference"

    # Slightly larger input to exercise the multi-chunk DMA path
    # (m=32 rows -> 4 chunks of 8 rows), still tiny.
    x2 = jax.random.normal(jax.random.PRNGKey(0), (2, 4, 32, 32),
                           dtype=jnp.float32)
    out2 = jax.block_until_ready(reshape_to_v256(x2, materialize=True))
    assert jnp.array_equal(out2, x2.reshape(-1, 256)), "multi-chunk mismatch"

    print("KERNEL_OK")
</pallas_src>

<mosaic_0001>
module attributes {stable_mosaic.version = 11 : i64} {
  func.func @kernel(%arg0: memref<8x256xf32, #tpu.memory_space<any>>, %arg1: memref<8x256xf32, #tpu.memory_space<any>>, %arg2: memref<1x!tpu.dma_semaphore, #tpu.memory_space<semaphore_mem>>) attributes {dimension_semantics = [], scalar_prefetch = 0 : i64, scratch_operands = 1 : i64, tpu.core_type = #tpu.core_type<tc>} {
    %c0_i32 = arith.constant 0 : i32
    %c0_i32_0 = arith.constant 0 : i32
    %c0_i32_1 = arith.constant 0 : i32
    %0 = tpu.memref_slice %arg0[%c0_i32_0, %c0_i32_1] : memref<8x256xf32, #tpu.memory_space<any>> -> memref<8x256xf32, #tpu.memory_space<any>>
    %c0_i32_2 = arith.constant 0 : i32
    %c0_i32_3 = arith.constant 0 : i32
    %1 = tpu.memref_slice %arg1[%c0_i32_2, %c0_i32_3] : memref<8x256xf32, #tpu.memory_space<any>> -> memref<8x256xf32, #tpu.memory_space<any>>
    %2 = tpu.memref_slice %arg2[%c0_i32] : memref<1x!tpu.dma_semaphore, #tpu.memory_space<semaphore_mem>> -> memref<1x!tpu.dma_semaphore, #tpu.memory_space<semaphore_mem>>
    %3 = tpu.memref_squeeze %2 : memref<1x!tpu.dma_semaphore, #tpu.memory_space<semaphore_mem>> -> memref<!tpu.dma_semaphore, #tpu.memory_space<semaphore_mem>>
    tpu.enqueue_dma source(%0 : memref<8x256xf32, #tpu.memory_space<any>>) target(%1 : memref<8x256xf32, #tpu.memory_space<any>>) target_semaphore(%3 : memref<!tpu.dma_semaphore, #tpu.memory_space<semaphore_mem>>)
    %c0_i32_4 = arith.constant 0 : i32
    %c0_i32_5 = arith.constant 0 : i32
    %c0_i32_6 = arith.constant 0 : i32
    %4 = tpu.memref_slice %arg0[%c0_i32_5, %c0_i32_6] : memref<8x256xf32, #tpu.memory_space<any>> -> memref<8x256xf32, #tpu.memory_space<any>>
    %c0_i32_7 = arith.constant 0 : i32
    %c0_i32_8 = arith.constant 0 : i32
    %5 = tpu.memref_slice %arg1[%c0_i32_7, %c0_i32_8] : memref<8x256xf32, #tpu.memory_space<any>> -> memref<8x256xf32, #tpu.memory_space<any>>
    %6 = tpu.memref_slice %arg2[%c0_i32_4] : memref<1x!tpu.dma_semaphore, #tpu.memory_space<semaphore_mem>> -> memref<1x!tpu.dma_semaphore, #tpu.memory_space<semaphore_mem>>
    %7 = tpu.memref_squeeze %6 : memref<1x!tpu.dma_semaphore, #tpu.memory_space<semaphore_mem>> -> memref<!tpu.dma_semaphore, #tpu.memory_space<semaphore_mem>>
    tpu.wait_dma2 semaphore(%7 : memref<!tpu.dma_semaphore, #tpu.memory_space<semaphore_mem>>) src(%4 : memref<8x256xf32, #tpu.memory_space<any>>) dst(%5 : memref<8x256xf32, #tpu.memory_space<any>>)
    return
  }
}

</mosaic_0001>

<llo_original>
// kernel: tpu_custom_call.1
$region0: #{tpu_custom_call.1}
  #allocation0 [shape = 'u32[]', space=smem, size = 0x4, offset = 0x4, fixed_abs, tag = 'smem constant byte address 0x4 - core index']
  #allocation1 [shape = 'u32[144,128]{1,0:T(1,128)}', space=vmem, size = 0x12000, scoped, tag = 'internal scratch']
  #allocation2 [shape = 's32[1]{0}', space=sflag, size = 0x4, scoped, tag = 'scratch operand']
  #allocation3 [shape = 's32[]', space=sflag, size = 0x4, offset = 0, fixed_abs, tag = 'sflag constant byte address 0x0 - dummy sync flag']
  #allocation4 [shape = 'u32[0]{0}', space=smem, size = 0, offset = 0, fixed_abs, tag = 'smem constant byte address 0x0 - null']
  %s0 = inlined_call_operand.hbm [shape: f32[8,256], index: 0, kind: input, shape index: {}]
  %s1 = inlined_call_operand.hbm [shape: f32[8,256], index: 1, kind: output, shape index: {}]
  %s2 = sld [smem:[#allocation0]]
  $region2: #{tpu_custom_call.1} parent=0
    _
  %s4 = ssub.s32 1, %s2
  %s5 = scalar_select 0, %s4, %s2
  %s7 = sshll.u32 1, 14
  %s8 = sxor.u32 4294967295, %s7
  %12 = dma.general %s0, 256, %s1, [#allocation2], 131072, [#allocation4], 0, 0
  %s13 = smul.u32 8, 1
  %s14 = smul.u32 %s13, 2
  %s15 = sshll.u32 %s14, 4
  %16 = dma.done [#allocation2], %s15
  %17 = vsyncmov [#allocation2]
  %s18 = vpop.sfrf %17
  %p19 = scmp.eq.s32.totalorder %s18, 0
  %p20 = pneg %p19
  %22 = shalt.err (%p20)

</llo_original>
